<compile_context>
chip_gen: v6e
topology: v6e:2x2x1
jax: 0.10.0
libtpu: 0.0.40
codegen_flags: <defaults>
</compile_context>

<pallas_src>
import jax
import jax.numpy as jnp
from jax.experimental import pallas as pl
from jax.experimental.pallas import tpu as pltpu


def mlp_kernel(x_ref, w1_ref, b1_ref, w23_ref, b23_ref, o_ref):
    # x_ref: (tm, E) f32 tile; w1_ref: (E, 512) bf16; b1/w23: (1, 512) f32;
    # b23: (1, 1) f32 scalar in SMEM; o_ref: (tm, 1) f32.
    x = x_ref[...].astype(jnp.bfloat16)                 # in-kernel cast (VPU)
    h1 = jnp.dot(x, w1_ref[...],
                 preferred_element_type=jnp.float32) + b1_ref[...]   # (tm, 512)
    # Folded Linear(512->128)->Linear(128->1): VPU multiply + lane reduction
    # against the precomputed (1, 512) effective weight row.
    logits = jnp.sum(h1 * w23_ref[...], axis=-1, keepdims=True) + b23_ref[0, 0]
    o_ref[...] = jax.nn.sigmoid(logits)                 # EUP, f32, (tm, 1)


@jax.jit
def lstm_net_forward(x, w1, b1, w2, b2, w3, b3):
    """x: (batch, E) any float dtype; weights in (in, out) layout."""
    batch, embedding_dim = x.shape
    h1_dim = w1.shape[1]                                 # 512

    # ---- batch-aware tile selection (all static under jit) ----------------
    tm = 512                                             # big tile: amortize ~0.35us/step
    padded128 = pl.cdiv(batch, 128) * 128
    tm = min(tm, padded128)
    if padded128 > 128 and tm >= padded128:
        # keep >= 2 tiles so v7x's two TensorCores both get work
        tm = max(128, ((padded128 // 2) // 128) * 128)
    padded = pl.cdiv(batch, tm) * tm
    num_tiles = padded // tm

    # ---- input prep (torch `inputs.float()` semantics) --------------------
    x32 = x.astype(jnp.float32)
    if padded != batch:
        x32 = jnp.pad(x32, ((0, padded - batch), (0, 0)))

    # ---- weight prep: bf16 first layer, affine fold of layers 2+3 ---------
    w1b = w1.astype(jnp.bfloat16)                        # (E, 512) MXU operand
    b1f = b1.reshape(1, h1_dim).astype(jnp.float32)      # (1, 512)
    w2f = w2.astype(jnp.float32)                         # (512, 128)
    w3f = w3.astype(jnp.float32)                         # (128, 1)
    w23 = (w2f @ w3f).reshape(1, h1_dim)                 # (1, 512) f32
    b23 = (b2.reshape(1, -1).astype(jnp.float32) @ w3f
           + b3.reshape(1, 1).astype(jnp.float32))       # (1, 1) f32 -> SMEM

    # ---- cost estimate for the folded network -----------------------------
    flops = 2 * padded * (embedding_dim * h1_dim + h1_dim)
    bytes_accessed = (
        padded * embedding_dim * 4                       # x f32 read
        + embedding_dim * h1_dim * 2                     # w1 bf16
        + h1_dim * 4 * 2 + 4                             # b1, w23, b23
        + padded * 4                                     # (padded, 1) output
    )

    out = pl.pallas_call(
        mlp_kernel,
        out_shape=jax.ShapeDtypeStruct((padded, 1), jnp.float32),
        grid_spec=pltpu.PrefetchScalarGridSpec(
            num_scalar_prefetch=0,
            grid=(num_tiles,),
            in_specs=[
                # Per-tile activation traffic (auto double-buffered).
                pl.BlockSpec((tm, embedding_dim), lambda i: (i, 0)),
                # Weights/biases: constant block index -> DMA'd once, resident.
                pl.BlockSpec((embedding_dim, h1_dim), lambda i: (0, 0)),
                pl.BlockSpec((1, h1_dim), lambda i: (0, 0)),
                pl.BlockSpec((1, h1_dim), lambda i: (0, 0)),
                pl.BlockSpec(memory_space=pltpu.MemorySpace.SMEM),  # b23 scalar
            ],
            # (tm, 1) block: last block dim equals the full array dim -> legal.
            out_specs=pl.BlockSpec((tm, 1), lambda i: (i, 0)),
        ),
        compiler_params=pltpu.CompilerParams(
            dimension_semantics=("parallel",)),
        cost_estimate=pl.CostEstimate(
            flops=flops, transcendentals=padded, bytes_accessed=bytes_accessed),
    )(x32, w1b, b1f, w23, b23)

    return out[:batch]                                   # (batch, 1)


def init_params(embedding_dim, key):
    k1, k2, k3, k4, k5, k6 = jax.random.split(key, 6)
    # Deterministic small-magnitude init (synthetic weights, not a checkpoint).
    w1 = jax.random.normal(k1, (embedding_dim, 512), jnp.float32) * 0.02
    b1 = jax.random.normal(k2, (1, 512), jnp.float32) * 0.02
    w2 = jax.random.normal(k3, (512, 128), jnp.float32) * 0.02
    b2 = jax.random.normal(k4, (1, 128), jnp.float32) * 0.02
    w3 = jax.random.normal(k5, (128, 1), jnp.float32) * 0.02
    b3 = jax.random.normal(k6, (1, 1), jnp.float32) * 0.02
    return w1, b1, w2, b2, w3, b3


if __name__ == "__main__":
    embedding_dim = 256
    batch = 200  # not a multiple of 128: exercises padding AND >=2 tiles for v7x

    key = jax.random.PRNGKey(0)
    k_x, k_p = jax.random.split(key)
    x = jax.random.normal(k_x, (batch, embedding_dim), jnp.float32)
    params = init_params(embedding_dim, k_p)

    out = lstm_net_forward(x, *params)
    out = jax.block_until_ready(out)

    # Reference in plain f32 JAX (same math as the PyTorch module). Tolerance
    # relaxed because the kernel uses bf16 matmul operands for layer 1.
    w1, b1, w2, b2, w3, b3 = params
    ref = jax.nn.sigmoid(((x @ w1 + b1) @ w2 + b2) @ w3 + b3)
    assert out.shape == (batch, 1)
    assert jnp.allclose(out, ref, atol=2e-2, rtol=2e-2)

    print("KERNEL_OK")
</pallas_src>

<mosaic_0001>
module attributes {stable_mosaic.version = 11 : i64} {
  func.func @mlp_kernel(%arg0: i32, %arg1: memref<128x256xf32, #tpu.memory_space<vmem>>, %arg2: memref<256x512xbf16, #tpu.memory_space<vmem>>, %arg3: memref<1x512xf32, #tpu.memory_space<vmem>>, %arg4: memref<1x512xf32, #tpu.memory_space<vmem>>, %arg5: memref<1x1xf32, #tpu.memory_space<smem>>, %arg6: memref<128x1xf32, #tpu.memory_space<vmem>>) attributes {dimension_semantics = [#tpu.dimension_semantics<parallel>], iteration_bounds = array<i64: 2>, scalar_prefetch = 0 : i64, scratch_operands = 0 : i64, tpu.core_type = #tpu.core_type<tc>, window_params = [{transform_indices = @transform_0, window_bounds = array<i64: 128, 256>}, {pipeline_mode = #tpu.pipeline_mode<synchronous>, transform_indices = @transform_1, window_bounds = array<i64: 256, 512>}, {pipeline_mode = #tpu.pipeline_mode<synchronous>, transform_indices = @transform_2, window_bounds = array<i64: 1, 512>}, {pipeline_mode = #tpu.pipeline_mode<synchronous>, transform_indices = @transform_3, window_bounds = array<i64: 1, 512>}, {transform_indices = @transform_4, window_bounds = array<i64: 1, 1>}, {transform_indices = @transform_5, window_bounds = array<i64: 128, 1>}]} {
    %c0 = arith.constant 0 : index
    %c0_0 = arith.constant 0 : index
    %0 = vector.load %arg1[%c0, %c0_0] : memref<128x256xf32, #tpu.memory_space<vmem>>, vector<128x256xf32>
    %1 = arith.truncf %0 : vector<128x256xf32> to vector<128x256xbf16>
    %c0_1 = arith.constant 0 : index
    %c0_2 = arith.constant 0 : index
    %2 = vector.load %arg2[%c0_1, %c0_2] : memref<256x512xbf16, #tpu.memory_space<vmem>>, vector<256x512xbf16>
    %cst = arith.constant dense<0.000000e+00> : vector<128x512xf32>
    %3 = tpu.matmul %1, %2, %cst {dimension_numbers = #tpu.dot_dimension_numbers<[1], [0], [0], [1], [0, 0, 1, 1], [], []>} : vector<128x256xbf16>, vector<256x512xbf16>, vector<128x512xf32> -> vector<128x512xf32>
    %c0_3 = arith.constant 0 : index
    %c0_4 = arith.constant 0 : index
    %4 = vector.load %arg3[%c0_3, %c0_4] : memref<1x512xf32, #tpu.memory_space<vmem>>, vector<1x512xf32>
    %5 = vector.broadcast %4 : vector<1x512xf32> to vector<128x512xf32>
    %6 = arith.addf %3, %5 : vector<128x512xf32>
    %c0_5 = arith.constant 0 : index
    %c0_6 = arith.constant 0 : index
    %7 = vector.load %arg4[%c0_5, %c0_6] : memref<1x512xf32, #tpu.memory_space<vmem>>, vector<1x512xf32>
    %8 = vector.broadcast %7 : vector<1x512xf32> to vector<128x512xf32>
    %9 = arith.mulf %6, %8 : vector<128x512xf32>
    %cst_7 = arith.constant dense<0.000000e+00> : vector<128xf32>
    %10 = vector.multi_reduction <add>, %9, %cst_7 [1] : vector<128x512xf32> to vector<128xf32>
    %11 = vector.shape_cast %10 : vector<128xf32> to vector<128x1xf32>
    %c0_8 = arith.constant 0 : index
    %c0_9 = arith.constant 0 : index
    %12 = memref.load %arg5[%c0_8, %c0_9] : memref<1x1xf32, #tpu.memory_space<smem>>
    %13 = vector.broadcast %12 : f32 to vector<128x1xf32>
    %14 = arith.addf %11, %13 : vector<128x1xf32>
    %15 = arith.negf %14 : vector<128x1xf32>
    %16 = math.exp %15 : vector<128x1xf32>
    %cst_10 = arith.constant 1.000000e+00 : f32
    %17 = vector.broadcast %cst_10 : f32 to vector<128x1xf32>
    %18 = arith.addf %17, %16 : vector<128x1xf32>
    %19 = arith.divf %17, %18 : vector<128x1xf32>
    %c0_11 = arith.constant 0 : index
    %c0_12 = arith.constant 0 : index
    %20 = vector.load %arg6[%c0_11, %c0_12] : memref<128x1xf32, #tpu.memory_space<vmem>>, vector<128x1xf32>
    tpu.vector_store %arg6[%c0_11, %c0_12], %19 {strides = array<i32>} : memref<128x1xf32, #tpu.memory_space<vmem>>, vector<128x1xf32>,
    return
  }
  func.func @transform_0(%arg0: i32) -> (i32, i32) {
    %c0_i32 = arith.constant 0 : i32
    %c0_i32_0 = arith.constant 0 : i32
    return %arg0, %c0_i32 : i32, i32
  }
  func.func @transform_1(%arg0: i32) -> (i32, i32) {
    %c0_i32 = arith.constant 0 : i32
    %c0_i32_0 = arith.constant 0 : i32
    %c0_i32_1 = arith.constant 0 : i32
    return %c0_i32, %c0_i32_0 : i32, i32
  }
  func.func @transform_2(%arg0: i32) -> (i32, i32) {
    %c0_i32 = arith.constant 0 : i32
    %c0_i32_0 = arith.constant 0 : i32
    %c0_i32_1 = arith.constant 0 : i32
    return %c0_i32, %c0_i32_0 : i32, i32
  }
  func.func @transform_3(%arg0: i32) -> (i32, i32) {
    %c0_i32 = arith.constant 0 : i32
    %c0_i32_0 = arith.constant 0 : i32
    %c0_i32_1 = arith.constant 0 : i32
    return %c0_i32, %c0_i32_0 : i32, i32
  }
  func.func @transform_4(%arg0: i32) -> (i32, i32) {
    %c0_i32 = arith.constant 0 : i32
    %c0_i32_0 = arith.constant 0 : i32
    %c0_i32_1 = arith.constant 0 : i32
    return %c0_i32, %c0_i32_0 : i32, i32
  }
  func.func @transform_5(%arg0: i32) -> (i32, i32) {
    %c0_i32 = arith.constant 0 : i32
    %c0_i32_0 = arith.constant 0 : i32
    return %arg0, %c0_i32 : i32, i32
  }
}

</mosaic_0001>

<llo_original>
// kernel: lstm_net_forward.1
$region0: #{lstm_net_forward.1}
  #allocation0 [shape = 'u32[]', space=smem, size = 0x4, offset = 0x4, fixed_abs, tag = 'smem constant byte address 0x4 - core index']
  #allocation1 [shape = 'u32[144,128]{1,0:T(1,128)}', space=vmem, size = 0x12000, scoped, tag = 'internal scratch']
  #allocation2 [shape = 'f32[1,1]{1,0:T(1,128)S(6)}', space=smem, size = 0x200, scoped, tag = 'scoped memory for lstm_net_forward.1']
  %s0 = inlined_call_operand.vmem [shape: f32[256,256], index: 0, kind: input, shape index: {}]
  %s1 = inlined_call_operand.vmem [shape: bf16[256,512], index: 1, kind: input, shape index: {}]
  %s2 = inlined_call_operand.vmem [shape: f32[1,512], index: 2, kind: input, shape index: {}]
  %s3 = inlined_call_operand.vmem [shape: f32[1,512], index: 3, kind: input, shape index: {}]
  %s4 = inlined_call_operand.<no memory space> [shape: f32[1,1], index: 4, kind: input, shape index: {}]
  %s5 = inlined_call_operand.vmem [shape: f32[256,1], index: 5, kind: output, shape index: {}]
  %s6 = sld [smem:[#allocation0]]
  $region53: #{lstm_net_forward.1} parent=0
    _
  %s8 = ssub.s32 1, %s6
  %s9 = scalar_select 0, %s8, %s6
  %10 = sst [smem:[#allocation2]] %s4
  loop: start=0, step=1, limit=4
  $region2: #{lstm_net_forward.1} parent=0 // loop_pre_header
    _
  $region3: #{lstm_net_forward.1} parent=0 // loop_header
    %s12 = sphi 0, %s16
    %p13 = scmp.ge.s32.totalorder %s12, 4
    %s22 = sphi 0, %s24
    %s25 = sphi 0, %s22
    %s26 = sphi 0, %s25
    %s42 = sphi 0, %s26
    %s46 = sphi 0, %s46
    %s48 = sphi 0, %s46
    %s49 = sphi 0, %s48
    %s63 = sphi 0, %s49
    %s67 = sphi 0, %s67
    %s69 = sphi 0, %s67
    %s70 = sphi 0, %s69
    %s84 = sphi 0, %s70
    %s88 = sphi 0, %s88
    %s90 = sphi 0, %s88
    %s91 = sphi 0, %s90
    %s105 = sphi 0, %s91
    %s109 = sphi 0, %s109
    %s111 = sphi 0, %s109
    %s112 = sphi 0, %s111
    %s126 = sphi 0, %s112
    %s132 = sphi 0, %s134
    %s135 = sphi 0, %s132
    %s136 = sphi 0, %s135
    %s152 = sphi 0, %s136
  $region4: #{lstm_net_forward.1} parent=0 // loop_header_branch
    %15 = sbr.rel (%p13) target = $region8
  $region5: #{lstm_net_forward.1} parent=0 // loop_body
    %s17 = ssub.s32 %s12, 1
    %s18 = ssub.s32 %s12, 2
    %s19 = sadd.s32 %s12, 1
    %s20 = ssub.s32 %s12, %s19
    %p21 = scmp.eq.s32.totalorder %s20, 0
    %s23 = sadd.s32 %s22, 1
    %s24 = scalar_select %p21, %s22, %s23
    %p27 = pneg %p21
    %p28 = scmp.eq.s32.totalorder %s12, 1
    %p29 = por %p27, %p28
    %p30 = scmp.ne.s32.totalorder %s22, %s25
    %p31 = scmp.eq.s32.totalorder %s12, 0
    %p32 = por %p30, %p31
    %p33 = scmp.ne.s32.totalorder %s22, %s25
    %p34 = scmp.eq.s32.totalorder %s17, 1
    %p35 = por %p33, %p34
    %p36 = scmp.ne.s32.totalorder %s25, %s26
    %p37 = scmp.eq.s32.totalorder %s17, 0
    %p38 = por %p36, %p37
    %p39 = scmp.ne.s32.totalorder %s25, %s26
    %p40 = scmp.eq.s32.totalorder %s18, 1
    %p41 = por %p39, %p40
    %p43 = scmp.ne.s32.totalorder %s26, %s42
    %p44 = scmp.eq.s32.totalorder %s18, 0
    %p45 = por %p43, %p44
    %s47 = sadd.s32 %s46, 1
    %p50 = scmp.eq.s32.totalorder %s12, 1
    %p51 = scmp.ne.s32.totalorder %s46, %s48
    %p52 = scmp.eq.s32.totalorder %s12, 0
    %p53 = por %p51, %p52
    %p54 = scmp.ne.s32.totalorder %s46, %s48
    %p55 = scmp.eq.s32.totalorder %s17, 1
    %p56 = por %p54, %p55
    %p57 = scmp.ne.s32.totalorder %s48, %s49
    %p58 = scmp.eq.s32.totalorder %s17, 0
    %p59 = por %p57, %p58
    %p60 = scmp.ne.s32.totalorder %s48, %s49
    %p61 = scmp.eq.s32.totalorder %s18, 1
    %p62 = por %p60, %p61
    %p64 = scmp.ne.s32.totalorder %s49, %s63
    %p65 = scmp.eq.s32.totalorder %s18, 0
    %p66 = por %p64, %p65
    %s68 = sadd.s32 %s67, 1
    %p71 = scmp.eq.s32.totalorder %s12, 1
    %p72 = scmp.ne.s32.totalorder %s67, %s69
    %p73 = scmp.eq.s32.totalorder %s12, 0
    %p74 = por %p72, %p73
    %p75 = scmp.ne.s32.totalorder %s67, %s69
    %p76 = scmp.eq.s32.totalorder %s17, 1
    %p77 = por %p75, %p76
    %p78 = scmp.ne.s32.totalorder %s69, %s70
    %p79 = scmp.eq.s32.totalorder %s17, 0
    %p80 = por %p78, %p79
    %p81 = scmp.ne.s32.totalorder %s69, %s70
    %p82 = scmp.eq.s32.totalorder %s18, 1
    %p83 = por %p81, %p82
    %p85 = scmp.ne.s32.totalorder %s70, %s84
    %p86 = scmp.eq.s32.totalorder %s18, 0
    %p87 = por %p85, %p86
    %s89 = sadd.s32 %s88, 1
    %p92 = scmp.eq.s32.totalorder %s12, 1
    %p93 = scmp.ne.s32.totalorder %s88, %s90
    %p94 = scmp.eq.s32.totalorder %s12, 0
    %p95 = por %p93, %p94
    %p96 = scmp.ne.s32.totalorder %s88, %s90
    %p97 = scmp.eq.s32.totalorder %s17, 1
    %p98 = por %p96, %p97
    %p99 = scmp.ne.s32.totalorder %s90, %s91
    %p100 = scmp.eq.s32.totalorder %s17, 0
    %p101 = por %p99, %p100
    %p102 = scmp.ne.s32.totalorder %s90, %s91
    %p103 = scmp.eq.s32.totalorder %s18, 1
    %p104 = por %p102, %p103
    %p106 = scmp.ne.s32.totalorder %s91, %s105
    %p107 = scmp.eq.s32.totalorder %s18, 0
    %p108 = por %p106, %p107
    %s110 = sadd.s32 %s109, 1
    %p113 = scmp.eq.s32.totalorder %s12, 1
    %p114 = scmp.ne.s32.totalorder %s109, %s111
    %p115 = scmp.eq.s32.totalorder %s12, 0
    %p116 = por %p114, %p115
    %p117 = scmp.ne.s32.totalorder %s109, %s111
    %p118 = scmp.eq.s32.totalorder %s17, 1
    %p119 = por %p117, %p118
    %p120 = scmp.ne.s32.totalorder %s111, %s112
    %p121 = scmp.eq.s32.totalorder %s17, 0
    %p122 = por %p120, %p121
    %p123 = scmp.ne.s32.totalorder %s111, %s112
    %p124 = scmp.eq.s32.totalorder %s18, 1
    %p125 = por %p123, %p124
    %p127 = scmp.ne.s32.totalorder %s112, %s126
    %p128 = scmp.eq.s32.totalorder %s18, 0
    %p129 = por %p127, %p128
    %s130 = ssub.s32 %s12, %s19
    %p131 = scmp.eq.s32.totalorder %s130, 0
    %s133 = sadd.s32 %s132, 1
    %s134 = scalar_select %p131, %s132, %s133
    %p137 = pneg %p131
    %p138 = scmp.eq.s32.totalorder %s12, 1
    %p139 = por %p137, %p138
    %p140 = scmp.ne.s32.totalorder %s132, %s135
    %p141 = scmp.eq.s32.totalorder %s12, 0
    %p142 = por %p140, %p141
    %p143 = scmp.ne.s32.totalorder %s132, %s135
    %p144 = scmp.eq.s32.totalorder %s17, 1
    %p145 = por %p143, %p144
    %p146 = scmp.ne.s32.totalorder %s135, %s136
    %p147 = scmp.eq.s32.totalorder %s17, 0
    %p148 = por %p146, %p147
    %p149 = scmp.ne.s32.totalorder %s135, %s136
    %p150 = scmp.eq.s32.totalorder %s18, 1
    %p151 = por %p149, %p150
    %p153 = scmp.ne.s32.totalorder %s136, %s152
    %p154 = scmp.eq.s32.totalorder %s18, 0
    %p155 = por %p153, %p154
    %p156 = scmp.le.s32.totalorder 1, %s12
    %p157 = scmp.lt.s32.totalorder %s12, 3
    %p158 = pnand %p156, %p157
    %p159 = pneg %p158
    // Predicated region
    $region9: #{lstm_net_forward.1} parent=5 // pred_check
      _
    $region10: #{lstm_net_forward.1} parent=5 // pred_check_branch
      %161 = sbr.rel (%p158) target = $region12
    $region11: #{lstm_net_forward.1} parent=5 // pred_region
      %s162 = ssub.s32 %s12, 1
      // Predicated region
      $region13: #{lstm_net_forward.1} parent=11 // pred_check
        %p163 = pneg %p59
      $region14: #{lstm_net_forward.1} parent=11 // pred_check_branch
        %165 = sbr.rel (%p163) target = $region16
      $region15: #{lstm_net_forward.1} parent=11 // pred_region
        _
      $region16: #{lstm_net_forward.1} parent=11 // pred_fallthru
        _
      // Predicated region
      $region17: #{lstm_net_forward.1} parent=11 // pred_check
        %p166 = pneg %p80
      $region18: #{lstm_net_forward.1} parent=11 // pred_check_branch
        %168 = sbr.rel (%p166) target = $region20
      $region19: #{lstm_net_forward.1} parent=11 // pred_region
        _
      $region20: #{lstm_net_forward.1} parent=11 // pred_fallthru
        _
      // Predicated region
      $region21: #{lstm_net_forward.1} parent=11 // pred_check
        %p169 = pneg %p101
      $region22: #{lstm_net_forward.1} parent=11 // pred_check_branch
        %171 = sbr.rel (%p169) target = $region24
      $region23: #{lstm_net_forward.1} parent=11 // pred_region
        _
      $region24: #{lstm_net_forward.1} parent=11 // pred_fallthru
        _
      // Predicated region
      $region25: #{lstm_net_forward.1} parent=11 // pred_check
        %p172 = pneg %p122
      $region26: #{lstm_net_forward.1} parent=11 // pred_check_branch
        %174 = sbr.rel (%p172) target = $region28
      $region27: #{lstm_net_forward.1} parent=11 // pred_region
        _
      $region28: #{lstm_net_forward.1} parent=11 // pred_fallthru
        _
    $region12: #{lstm_net_forward.1} parent=5 // pred_fallthru
      _
    %p175 = scmp.lt.s32.totalorder %s12, 2
    // Predicated region
    $region29: #{lstm_net_forward.1} parent=5 // pred_check
      %p176 = pneg %p175
    $region30: #{lstm_net_forward.1} parent=5 // pred_check_branch
      %178 = sbr.rel (%p176) target = $region32
    $region31: #{lstm_net_forward.1} parent=5 // pred_region
      // Predicated region
      $region33: #{lstm_net_forward.1} parent=31 // pred_check
        %p179 = pneg %p32
      $region34: #{lstm_net_forward.1} parent=31 // pred_check_branch
        %181 = sbr.rel (%p179) target = $region36
      $region35: #{lstm_net_forward.1} parent=31 // pred_region
        %s182 = smul.u32 16, %s12
        %p183 = scmp.lt.s32.totalorder %s182, 31
        %s184 = scalar_select %p183, %s182, 31
        %s185 = smul.addr %s184, 2
        %s186 = smul.addr %s185, 8
        %s187 = scalar_lea.vmem %s0, %s186
        %s188 = smul.u32 16, %s12
      $region36: #{lstm_net_forward.1} parent=31 // pred_fallthru
        _
    $region32: #{lstm_net_forward.1} parent=5 // pred_fallthru
      _
    %p189 = scmp.le.s32.totalorder 1, %s12
    %p190 = scmp.lt.s32.totalorder %s12, 3
    %p191 = pnand %p189, %p190
    %p192 = pneg %p191
    // Predicated region
    $region37: #{lstm_net_forward.1} parent=5 // pred_check
      _
    $region38: #{lstm_net_forward.1} parent=5 // pred_check_branch
      %194 = sbr.rel (%p191) target = $region40
    $region39: #{lstm_net_forward.1} parent=5 // pred_region
      %s195 = ssub.s32 %s12, 1
      %s196 = smul.u32 16, %s17
      %p197 = scmp.lt.s32.totalorder %s196, 31
      %s198 = scalar_select %p197, %s196, 31
      %s199 = smul.addr %s198, 2
      %s200 = smul.addr %s199, 8
      %s201 = scalar_lea.vmem %s0, %s200
      %p202 = pneg %p38
      %p203 = pneg %p35
      %p204 = pneg %p59
      %p205 = pneg %p56
      %p206 = pneg %p80
      %p207 = pneg %p77
      %p208 = pneg %p101
      %p209 = pneg %p98
      %p210 = pneg %p122
      %p211 = pneg %p119
      %p212 = pneg %p148
      %p213 = pneg %p145
      %s214 = smul.u32 16, %s17
      %p215 = scmp.lt.s32.totalorder %s214, 31
      %s216 = scalar_select %p215, %s214, 31
      %s217 = smul.addr %s216, 8
      %s218 = scalar_lea.vmem %s5, %s217
      %s219 = smul.u32 16, %s17
      %p220 = scmp.lt.s32.totalorder %s219, 31
      %s221 = scalar_select %p220, %s219, 31
      %s222 = smul.addr %s221, 2
      %s223 = smul.addr %s222, 8
      %s224 = scalar_lea.vmem %s0, %s223
      %s225 = smul.u32 16, %s17
      %s226 = smul.u32 16, %s17
      %p227 = scmp.lt.s32.totalorder %s226, 31
      %s228 = scalar_select %p227, %s226, 31
      %s229 = smul.addr %s228, 8
      %s230 = scalar_lea.vmem %s5, %s229
      %s231 = smul.u32 16, %s17
      %v232 = vld [vmem:[%s224] sm:$0xff]
      %v233 = vld [vmem:[%s224 + $0x8] sm:$0xff]
      %v234 = vld [vmem:[%s224 + $0x10] sm:$0xff]
      %v235 = vld [vmem:[%s224 + $0x18] sm:$0xff]
      %v236 = vld [vmem:[%s224 + $0x20] sm:$0xff]
      %v237 = vld [vmem:[%s224 + $0x28] sm:$0xff]
      %v238 = vld [vmem:[%s224 + $0x30] sm:$0xff]
      %v239 = vld [vmem:[%s224 + $0x38] sm:$0xff]
      %v240 = vld [vmem:[%s224 + $0x40] sm:$0xff]
      %v241 = vld [vmem:[%s224 + $0x48] sm:$0xff]
      %v242 = vld [vmem:[%s224 + $0x50] sm:$0xff]
      %v243 = vld [vmem:[%s224 + $0x58] sm:$0xff]
      %v244 = vld [vmem:[%s224 + $0x60] sm:$0xff]
      %v245 = vld [vmem:[%s224 + $0x68] sm:$0xff]
      %v246 = vld [vmem:[%s224 + $0x70] sm:$0xff]
      %v247 = vld [vmem:[%s224 + $0x78] sm:$0xff]
      %v248 = vld [vmem:[%s224 + $0x80] sm:$0xff]
      %v249 = vld [vmem:[%s224 + $0x88] sm:$0xff]
      %v250 = vld [vmem:[%s224 + $0x90] sm:$0xff]
      %v251 = vld [vmem:[%s224 + $0x98] sm:$0xff]
      %v252 = vld [vmem:[%s224 + $0xa0] sm:$0xff]
      %v253 = vld [vmem:[%s224 + $0xa8] sm:$0xff]
      %v254 = vld [vmem:[%s224 + $0xb0] sm:$0xff]
      %v255 = vld [vmem:[%s224 + $0xb8] sm:$0xff]
      %v256 = vld [vmem:[%s224 + $0xc0] sm:$0xff]
      %v257 = vld [vmem:[%s224 + $0xc8] sm:$0xff]
      %v258 = vld [vmem:[%s224 + $0xd0] sm:$0xff]
      %v259 = vld [vmem:[%s224 + $0xd8] sm:$0xff]
      %v260 = vld [vmem:[%s224 + $0xe0] sm:$0xff]
      %v261 = vld [vmem:[%s224 + $0xe8] sm:$0xff]
      %v262 = vld [vmem:[%s224 + $0xf0] sm:$0xff]
      %v263 = vld [vmem:[%s224 + $0xf8] sm:$0xff]
      %v264 = vpack.c.bf16 %v234, %v232
      %v265 = vpack.c.bf16 %v235, %v233
      %v266 = vpack.c.bf16 %v238, %v236
      %v267 = vpack.c.bf16 %v239, %v237
      %v268 = vpack.c.bf16 %v242, %v240
      %v269 = vpack.c.bf16 %v243, %v241
      %v270 = vpack.c.bf16 %v246, %v244
      %v271 = vpack.c.bf16 %v247, %v245
      %v272 = vpack.c.bf16 %v250, %v248
      %v273 = vpack.c.bf16 %v251, %v249
      %v274 = vpack.c.bf16 %v254, %v252
      %v275 = vpack.c.bf16 %v255, %v253
      %v276 = vpack.c.bf16 %v258, %v256
      %v277 = vpack.c.bf16 %v259, %v257
      %v278 = vpack.c.bf16 %v262, %v260
      %v279 = vpack.c.bf16 %v263, %v261
      %v280 = vld [vmem:[%s1] sm:$0xff]
      %v281 = vld [vmem:[%s1 + $0x8] sm:$0xff]
      %v282 = vld [vmem:[%s1 + $0x10] sm:$0xff]
      %v283 = vld [vmem:[%s1 + $0x18] sm:$0xff]
      %v284 = vld [vmem:[%s1 + $0x20] sm:$0xff]
      %v285 = vld [vmem:[%s1 + $0x28] sm:$0xff]
      %v286 = vld [vmem:[%s1 + $0x30] sm:$0xff]
      %v287 = vld [vmem:[%s1 + $0x38] sm:$0xff]
      %v288 = vld [vmem:[%s1 + $0x40] sm:$0xff]
      %v289 = vld [vmem:[%s1 + $0x48] sm:$0xff]
      %v290 = vld [vmem:[%s1 + $0x50] sm:$0xff]
      %v291 = vld [vmem:[%s1 + $0x58] sm:$0xff]
      %v292 = vld [vmem:[%s1 + $0x60] sm:$0xff]
      %v293 = vld [vmem:[%s1 + $0x68] sm:$0xff]
      %v294 = vld [vmem:[%s1 + $0x70] sm:$0xff]
      %v295 = vld [vmem:[%s1 + $0x78] sm:$0xff]
      %v296 = vld [vmem:[%s1 + $0x80] sm:$0xff]
      %v297 = vld [vmem:[%s1 + $0x88] sm:$0xff]
      %v298 = vld [vmem:[%s1 + $0x90] sm:$0xff]
      %v299 = vld [vmem:[%s1 + $0x98] sm:$0xff]
      %v300 = vld [vmem:[%s1 + $0xa0] sm:$0xff]
      %v301 = vld [vmem:[%s1 + $0xa8] sm:$0xff]
      %v302 = vld [vmem:[%s1 + $0xb0] sm:$0xff]
      %v303 = vld [vmem:[%s1 + $0xb8] sm:$0xff]
      %v304 = vld [vmem:[%s1 + $0xc0] sm:$0xff]
      %v305 = vld [vmem:[%s1 + $0xc8] sm:$0xff]
      %v306 = vld [vmem:[%s1 + $0xd0] sm:$0xff]
      %v307 = vld [vmem:[%s1 + $0xd8] sm:$0xff]
      %v308 = vld [vmem:[%s1 + $0xe0] sm:$0xff]
      %v309 = vld [vmem:[%s1 + $0xe8] sm:$0xff]
      %v310 = vld [vmem:[%s1 + $0xf0] sm:$0xff]
      %v311 = vld [vmem:[%s1 + $0xf8] sm:$0xff]
      %v312 = vld [vmem:[%s1 + $0x100] sm:$0xff]
      %v313 = vld [vmem:[%s1 + $0x108] sm:$0xff]
      %v314 = vld [vmem:[%s1 + $0x110] sm:$0xff]
      %v315 = vld [vmem:[%s1 + $0x118] sm:$0xff]
      %v316 = vld [vmem:[%s1 + $0x120] sm:$0xff]
      %v317 = vld [vmem:[%s1 + $0x128] sm:$0xff]
      %v318 = vld [vmem:[%s1 + $0x130] sm:$0xff]
      %v319 = vld [vmem:[%s1 + $0x138] sm:$0xff]
      %v320 = vld [vmem:[%s1 + $0x140] sm:$0xff]
      %v321 = vld [vmem:[%s1 + $0x148] sm:$0xff]
      %v322 = vld [vmem:[%s1 + $0x150] sm:$0xff]
      %v323 = vld [vmem:[%s1 + $0x158] sm:$0xff]
      %v324 = vld [vmem:[%s1 + $0x160] sm:$0xff]
      %v325 = vld [vmem:[%s1 + $0x168] sm:$0xff]
      %v326 = vld [vmem:[%s1 + $0x170] sm:$0xff]
      %v327 = vld [vmem:[%s1 + $0x178] sm:$0xff]
      %v328 = vld [vmem:[%s1 + $0x180] sm:$0xff]
      %v329 = vld [vmem:[%s1 + $0x188] sm:$0xff]
      %v330 = vld [vmem:[%s1 + $0x190] sm:$0xff]
      %v331 = vld [vmem:[%s1 + $0x198] sm:$0xff]
      %v332 = vld [vmem:[%s1 + $0x1a0] sm:$0xff]
      %v333 = vld [vmem:[%s1 + $0x1a8] sm:$0xff]
      %v334 = vld [vmem:[%s1 + $0x1b0] sm:$0xff]
      %v335 = vld [vmem:[%s1 + $0x1b8] sm:$0xff]
      %v336 = vld [vmem:[%s1 + $0x1c0] sm:$0xff]
      %v337 = vld [vmem:[%s1 + $0x1c8] sm:$0xff]
      %v338 = vld [vmem:[%s1 + $0x1d0] sm:$0xff]
      %v339 = vld [vmem:[%s1 + $0x1d8] sm:$0xff]
      %v340 = vld [vmem:[%s1 + $0x1e0] sm:$0xff]
      %v341 = vld [vmem:[%s1 + $0x1e8] sm:$0xff]
      %v342 = vld [vmem:[%s1 + $0x1f0] sm:$0xff]
      %v343 = vld [vmem:[%s1 + $0x1f8] sm:$0xff]
      %v344 = vld [vmem:[%s2] sm:$0xf]
      %v346 = vlaneseq
      %v347 = vshrl.u32 %v346, 7
      %v348 = vsub.s32 0, %v347
      %v349 = vrot.slane %v344, %v348
      %v350 = vlaneseq
      %v351 = vshrl.u32 %v350, 7
      %v352 = vsub.s32 1, %v351
      %v353 = vrot.slane %v344, %v352
      %v354 = vlaneseq
      %v355 = vshrl.u32 %v354, 7
      %v356 = vsub.s32 2, %v355
      %v357 = vrot.slane %v344, %v356
      %v358 = vlaneseq
      %v359 = vshrl.u32 %v358, 7
      %v360 = vsub.s32 3, %v359
      %v361 = vrot.slane %v344, %v360
      %v430 = vunpack.c.l.b16 %v280
      %v431 = vunpack.c.h.b16 %v280
      %v432 = vunpack.c.l.b16 %v281
      %v433 = vunpack.c.h.b16 %v281
      %v434 = vunpack.c.l.b16 %v282
      %v435 = vunpack.c.h.b16 %v282
      %v436 = vunpack.c.l.b16 %v283
      %v437 = vunpack.c.h.b16 %v283
      %v438 = vunpack.c.l.b16 %v284
      %v439 = vunpack.c.h.b16 %v284
      %v440 = vunpack.c.l.b16 %v285
      %v441 = vunpack.c.h.b16 %v285
      %v442 = vunpack.c.l.b16 %v286
      %v443 = vunpack.c.h.b16 %v286
      %v444 = vunpack.c.l.b16 %v287
      %v445 = vunpack.c.h.b16 %v287
      %v446 = vunpack.c.l.b16 %v288
      %v447 = vunpack.c.h.b16 %v288
      %v448 = vunpack.c.l.b16 %v289
      %v449 = vunpack.c.h.b16 %v289
      %v450 = vunpack.c.l.b16 %v290
      %v451 = vunpack.c.h.b16 %v290
      %v452 = vunpack.c.l.b16 %v291
      %v453 = vunpack.c.h.b16 %v291
      %v454 = vunpack.c.l.b16 %v292
      %v455 = vunpack.c.h.b16 %v292
      %v456 = vunpack.c.l.b16 %v293
      %v457 = vunpack.c.h.b16 %v293
      %v458 = vunpack.c.l.b16 %v294
      %v459 = vunpack.c.h.b16 %v294
      %v460 = vunpack.c.l.b16 %v295
      %v461 = vunpack.c.h.b16 %v295
      %v462 = vunpack.c.l.b16 %v296
      %v463 = vunpack.c.h.b16 %v296
      %v464 = vunpack.c.l.b16 %v297
      %v465 = vunpack.c.h.b16 %v297
      %v466 = vunpack.c.l.b16 %v298
      %v467 = vunpack.c.h.b16 %v298
      %v468 = vunpack.c.l.b16 %v299
      %v469 = vunpack.c.h.b16 %v299
      %v470 = vunpack.c.l.b16 %v300
      %v471 = vunpack.c.h.b16 %v300
      %v472 = vunpack.c.l.b16 %v301
      %v473 = vunpack.c.h.b16 %v301
      %v474 = vunpack.c.l.b16 %v302
      %v475 = vunpack.c.h.b16 %v302
      %v476 = vunpack.c.l.b16 %v303
      %v477 = vunpack.c.h.b16 %v303
      %v478 = vunpack.c.l.b16 %v304
      %v479 = vunpack.c.h.b16 %v304
      %v480 = vunpack.c.l.b16 %v305
      %v481 = vunpack.c.h.b16 %v305
      %v482 = vunpack.c.l.b16 %v306
      %v483 = vunpack.c.h.b16 %v306
      %v484 = vunpack.c.l.b16 %v307
      %v485 = vunpack.c.h.b16 %v307
      %v486 = vunpack.c.l.b16 %v308
      %v487 = vunpack.c.h.b16 %v308
      %v488 = vunpack.c.l.b16 %v309
      %v489 = vunpack.c.h.b16 %v309
      %v490 = vunpack.c.l.b16 %v310
      %v491 = vunpack.c.h.b16 %v310
      %v492 = vunpack.c.l.b16 %v311
      %v493 = vunpack.c.h.b16 %v311
      %v494 = vunpack.c.l.b16 %v312
      %v495 = vunpack.c.h.b16 %v312
      %v496 = vunpack.c.l.b16 %v313
      %v497 = vunpack.c.h.b16 %v313
      %v498 = vunpack.c.l.b16 %v314
      %v499 = vunpack.c.h.b16 %v314
      %v500 = vunpack.c.l.b16 %v315
      %v501 = vunpack.c.h.b16 %v315
      %v502 = vunpack.c.l.b16 %v316
      %v503 = vunpack.c.h.b16 %v316
      %v504 = vunpack.c.l.b16 %v317
      %v505 = vunpack.c.h.b16 %v317
      %v506 = vunpack.c.l.b16 %v318
      %v507 = vunpack.c.h.b16 %v318
      %v508 = vunpack.c.l.b16 %v319
      %v509 = vunpack.c.h.b16 %v319
      %v510 = vunpack.c.l.b16 %v320
      %v511 = vunpack.c.h.b16 %v320
      %v512 = vunpack.c.l.b16 %v321
      %v513 = vunpack.c.h.b16 %v321
      %v514 = vunpack.c.l.b16 %v322
      %v515 = vunpack.c.h.b16 %v322
      %v516 = vunpack.c.l.b16 %v323
      %v517 = vunpack.c.h.b16 %v323
      %v518 = vunpack.c.l.b16 %v324
      %v519 = vunpack.c.h.b16 %v324
      %v520 = vunpack.c.l.b16 %v325
      %v521 = vunpack.c.h.b16 %v325
      %v522 = vunpack.c.l.b16 %v326
      %v523 = vunpack.c.h.b16 %v326
      %v524 = vunpack.c.l.b16 %v327
      %v525 = vunpack.c.h.b16 %v327
      %v526 = vunpack.c.l.b16 %v328
      %v527 = vunpack.c.h.b16 %v328
      %v528 = vunpack.c.l.b16 %v329
      %v529 = vunpack.c.h.b16 %v329
      %v530 = vunpack.c.l.b16 %v330
      %v531 = vunpack.c.h.b16 %v330
      %v532 = vunpack.c.l.b16 %v331
      %v533 = vunpack.c.h.b16 %v331
      %v534 = vunpack.c.l.b16 %v332
      %v535 = vunpack.c.h.b16 %v332
      %v536 = vunpack.c.l.b16 %v333
      %v537 = vunpack.c.h.b16 %v333
      %v538 = vunpack.c.l.b16 %v334
      %v539 = vunpack.c.h.b16 %v334
      %v540 = vunpack.c.l.b16 %v335
      %v541 = vunpack.c.h.b16 %v335
      %v542 = vunpack.c.l.b16 %v336
      %v543 = vunpack.c.h.b16 %v336
      %v544 = vunpack.c.l.b16 %v337
      %v545 = vunpack.c.h.b16 %v337
      %v546 = vunpack.c.l.b16 %v338
      %v547 = vunpack.c.h.b16 %v338
      %v548 = vunpack.c.l.b16 %v339
      %v549 = vunpack.c.h.b16 %v339
      %v550 = vunpack.c.l.b16 %v340
      %v551 = vunpack.c.h.b16 %v340
      %v552 = vunpack.c.l.b16 %v341
      %v553 = vunpack.c.h.b16 %v341
      %v554 = vunpack.c.l.b16 %v342
      %v555 = vunpack.c.h.b16 %v342
      %v556 = vunpack.c.l.b16 %v343
      %v557 = vunpack.c.h.b16 %v343
      %v558 = vpack.c.b16 %v434, %v430
      %v559 = vpack.c.b16 %v435, %v431
      %v560 = vpack.c.b16 %v436, %v432
      %v561 = vpack.c.b16 %v437, %v433
      %v562 = vpack.c.b16 %v442, %v438
      %v563 = vpack.c.b16 %v443, %v439
      %v564 = vpack.c.b16 %v444, %v440
      %v565 = vpack.c.b16 %v445, %v441
      %v566 = vpack.c.b16 %v450, %v446
      %v567 = vpack.c.b16 %v451, %v447
      %v568 = vpack.c.b16 %v452, %v448
      %v569 = vpack.c.b16 %v453, %v449
      %v570 = vpack.c.b16 %v458, %v454
      %v571 = vpack.c.b16 %v459, %v455
      %v572 = vpack.c.b16 %v460, %v456
      %v573 = vpack.c.b16 %v461, %v457
      %v574 = vpack.c.b16 %v466, %v462
      %v575 = vpack.c.b16 %v467, %v463
      %v576 = vpack.c.b16 %v468, %v464
      %v577 = vpack.c.b16 %v469, %v465
      %v578 = vpack.c.b16 %v474, %v470
      %v579 = vpack.c.b16 %v475, %v471
      %v580 = vpack.c.b16 %v476, %v472
      %v581 = vpack.c.b16 %v477, %v473
      %v582 = vpack.c.b16 %v482, %v478
      %v583 = vpack.c.b16 %v483, %v479
      %v584 = vpack.c.b16 %v484, %v480
      %v585 = vpack.c.b16 %v485, %v481
      %v586 = vpack.c.b16 %v490, %v486
      %v587 = vpack.c.b16 %v491, %v487
      %v588 = vpack.c.b16 %v492, %v488
      %v589 = vpack.c.b16 %v493, %v489
      %v590 = vpack.c.b16 %v498, %v494
      %v591 = vpack.c.b16 %v499, %v495
      %v592 = vpack.c.b16 %v500, %v496
      %v593 = vpack.c.b16 %v501, %v497
      %v594 = vpack.c.b16 %v506, %v502
      %v595 = vpack.c.b16 %v507, %v503
      %v596 = vpack.c.b16 %v508, %v504
      %v597 = vpack.c.b16 %v509, %v505
      %v598 = vpack.c.b16 %v514, %v510
      %v599 = vpack.c.b16 %v515, %v511
      %v600 = vpack.c.b16 %v516, %v512
      %v601 = vpack.c.b16 %v517, %v513
      %v602 = vpack.c.b16 %v522, %v518
      %v603 = vpack.c.b16 %v523, %v519
      %v604 = vpack.c.b16 %v524, %v520
      %v605 = vpack.c.b16 %v525, %v521
      %v606 = vpack.c.b16 %v530, %v526
      %v607 = vpack.c.b16 %v531, %v527
      %v608 = vpack.c.b16 %v532, %v528
      %v609 = vpack.c.b16 %v533, %v529
      %v610 = vpack.c.b16 %v538, %v534
      %v611 = vpack.c.b16 %v539, %v535
      %v612 = vpack.c.b16 %v540, %v536
      %v613 = vpack.c.b16 %v541, %v537
      %v614 = vpack.c.b16 %v546, %v542
      %v615 = vpack.c.b16 %v547, %v543
      %v616 = vpack.c.b16 %v548, %v544
      %v617 = vpack.c.b16 %v549, %v545
      %v618 = vpack.c.b16 %v554, %v550
      %v619 = vpack.c.b16 %v555, %v551
      %v620 = vpack.c.b16 %v556, %v552
      %v621 = vpack.c.b16 %v557, %v553
      %686 = vmatprep.subr.bf16.mxu0 %v587
      %687 = vmatpush1.bf16.msra.mxu0 %v586
      %688 = vmatprep.subr.bf16.mxu0 %v583
      %689 = vmatpush1.bf16.msra.mxu0 %v582
      %690 = vmatprep.subr.bf16.mxu0 %v579
      %691 = vmatpush1.bf16.msra.mxu0 %v578
      %692 = vmatprep.subr.bf16.mxu0 %v575
      %693 = vmatpush1.bf16.msra.mxu0 %v574
      %694 = vmatprep.subr.bf16.mxu0 %v571
      %695 = vmatpush1.bf16.msra.mxu0 %v570
      %696 = vmatprep.subr.bf16.mxu0 %v567
      %697 = vmatpush1.bf16.msra.mxu0 %v566
      %698 = vmatprep.subr.bf16.mxu0 %v563
      %699 = vmatpush1.bf16.msra.mxu0 %v562
      %700 = vmatprep.subr.bf16.mxu0 %v559
      %701 = vmatpush1.bf16.msra.mxu0 %v558
      %702 = vmatprep.subr.bf16.mxu0 %v619
      %703 = vmatpush2.bf16.msra.mxu0 %v618
      %704 = vmatprep.subr.bf16.mxu0 %v615
      %705 = vmatpush2.bf16.msra.mxu0 %v614
      %706 = vmatprep.subr.bf16.mxu0 %v611
      %707 = vmatpush2.bf16.msra.mxu0 %v610
      %708 = vmatprep.subr.bf16.mxu0 %v607
      %709 = vmatpush2.bf16.msra.mxu0 %v606
      %710 = vmatprep.subr.bf16.mxu0 %v603
      %711 = vmatpush2.bf16.msra.mxu0 %v602
      %712 = vmatprep.subr.bf16.mxu0 %v599
      %713 = vmatpush2.bf16.msra.mxu0 %v598
      %714 = vmatprep.subr.bf16.mxu0 %v595
      %715 = vmatpush2.bf16.msra.mxu0 %v594
      %716 = vmatprep.subr.bf16.mxu0 %v591
      %717 = vmatpush2.bf16.msra.mxu0 %v590
      %718 = vmatprep.mubr.bf16.mxu0 %v265
      %719 = vmatmul.mubr.bf16.gmra.mxu0 %v264
      %v720 = vpop.f32.mrf.mxu0
      %v721 = vadd.f32 %v349, %v720
      %v722 = vpop.f32.mrf.mxu0
      %v723 = vadd.f32 %v353, %v722
      %v724 = vpop.f32.mrf.mxu0
      %v725 = vadd.f32 %v349, %v724
      %v726 = vpop.f32.mrf.mxu0
      %v727 = vadd.f32 %v353, %v726
      %728 = vmatprep.mubr.bf16.mxu0 %v267
      %729 = vmatmul.mubr.bf16.gmra.mxu0 %v266
      %v730 = vpop.f32.mrf.mxu0
      %v731 = vadd.f32 %v349, %v730
      %v732 = vpop.f32.mrf.mxu0
      %v733 = vadd.f32 %v353, %v732
      %v734 = vpop.f32.mrf.mxu0
      %v735 = vadd.f32 %v349, %v734
      %v736 = vpop.f32.mrf.mxu0
      %v737 = vadd.f32 %v353, %v736
      %738 = vmatprep.mubr.bf16.mxu0 %v269
      %739 = vmatmul.mubr.bf16.gmra.mxu0 %v268
      %v740 = vpop.f32.mrf.mxu0
      %v741 = vadd.f32 %v349, %v740
      %v742 = vpop.f32.mrf.mxu0
      %v743 = vadd.f32 %v353, %v742
      %v744 = vpop.f32.mrf.mxu0
      %v745 = vadd.f32 %v349, %v744
      %v746 = vpop.f32.mrf.mxu0
      %v747 = vadd.f32 %v353, %v746
      %748 = vmatprep.mubr.bf16.mxu0 %v271
      %749 = vmatmul.mubr.bf16.gmra.mxu0 %v270
      %v750 = vpop.f32.mrf.mxu0
      %v751 = vadd.f32 %v349, %v750
      %v752 = vpop.f32.mrf.mxu0
      %v753 = vadd.f32 %v353, %v752
      %v754 = vpop.f32.mrf.mxu0
      %v755 = vadd.f32 %v349, %v754
      %v756 = vpop.f32.mrf.mxu0
      %v757 = vadd.f32 %v353, %v756
      %758 = vmatprep.mubr.bf16.mxu0 %v273
      %759 = vmatmul.mubr.bf16.gmra.mxu0 %v272
      %v760 = vpop.f32.mrf.mxu0
      %v761 = vadd.f32 %v349, %v760
      %v762 = vpop.f32.mrf.mxu0
      %v763 = vadd.f32 %v353, %v762
      %v764 = vpop.f32.mrf.mxu0
      %v765 = vadd.f32 %v349, %v764
      %v766 = vpop.f32.mrf.mxu0
      %v767 = vadd.f32 %v353, %v766
      %768 = vmatprep.mubr.bf16.mxu0 %v275
      %769 = vmatmul.mubr.bf16.gmra.mxu0 %v274
      %v770 = vpop.f32.mrf.mxu0
      %v771 = vadd.f32 %v349, %v770
      %v772 = vpop.f32.mrf.mxu0
      %v773 = vadd.f32 %v353, %v772
      %v774 = vpop.f32.mrf.mxu0
      %v775 = vadd.f32 %v349, %v774
      %v776 = vpop.f32.mrf.mxu0
      %v777 = vadd.f32 %v353, %v776
      %778 = vmatprep.mubr.bf16.mxu0 %v277
      %779 = vmatmul.mubr.bf16.gmra.mxu0 %v276
      %v780 = vpop.f32.mrf.mxu0
      %v781 = vadd.f32 %v349, %v780
      %v782 = vpop.f32.mrf.mxu0
      %v783 = vadd.f32 %v353, %v782
      %v784 = vpop.f32.mrf.mxu0
      %v785 = vadd.f32 %v349, %v784
      %v786 = vpop.f32.mrf.mxu0
      %v787 = vadd.f32 %v353, %v786
      %788 = vmatprep.mubr.bf16.mxu0 %v279
      %789 = vmatmul.mubr.bf16.gmra.mxu0 %v278
      %v790 = vpop.f32.mrf.mxu0
      %v791 = vadd.f32 %v349, %v790
      %v792 = vpop.f32.mrf.mxu0
      %v793 = vadd.f32 %v353, %v792
      %v794 = vpop.f32.mrf.mxu0
      %v795 = vadd.f32 %v349, %v794
      %v796 = vpop.f32.mrf.mxu0
      %v797 = vadd.f32 %v353, %v796
      %798 = vdwg.mxu0
      %799 = vmatprep.subr.bf16.mxu0 %v589
      %800 = vmatpush1.bf16.msra.mxu0 %v588
      %801 = vmatprep.subr.bf16.mxu0 %v585
      %802 = vmatpush1.bf16.msra.mxu0 %v584
      %803 = vmatprep.subr.bf16.mxu0 %v581
      %804 = vmatpush1.bf16.msra.mxu0 %v580
      %805 = vmatprep.subr.bf16.mxu0 %v577
      %806 = vmatpush1.bf16.msra.mxu0 %v576
      %807 = vmatprep.subr.bf16.mxu0 %v573
      %808 = vmatpush1.bf16.msra.mxu0 %v572
      %809 = vmatprep.subr.bf16.mxu0 %v569
      %810 = vmatpush1.bf16.msra.mxu0 %v568
      %811 = vmatprep.subr.bf16.mxu0 %v565
      %812 = vmatpush1.bf16.msra.mxu0 %v564
      %813 = vmatprep.subr.bf16.mxu0 %v561
      %814 = vmatpush1.bf16.msra.mxu0 %v560
      %815 = vmatprep.subr.bf16.mxu0 %v621
      %816 = vmatpush2.bf16.msra.mxu0 %v620
      %817 = vmatprep.subr.bf16.mxu0 %v617
      %818 = vmatpush2.bf16.msra.mxu0 %v616
      %819 = vmatprep.subr.bf16.mxu0 %v613
      %820 = vmatpush2.bf16.msra.mxu0 %v612
      %821 = vmatprep.subr.bf16.mxu0 %v609
      %822 = vmatpush2.bf16.msra.mxu0 %v608
      %823 = vmatprep.subr.bf16.mxu0 %v605
      %824 = vmatpush2.bf16.msra.mxu0 %v604
      %825 = vmatprep.subr.bf16.mxu0 %v601
      %826 = vmatpush2.bf16.msra.mxu0 %v600
      %827 = vmatprep.subr.bf16.mxu0 %v597
      %828 = vmatpush2.bf16.msra.mxu0 %v596
      %829 = vmatprep.subr.bf16.mxu0 %v593
      %830 = vmatpush2.bf16.msra.mxu0 %v592
      %831 = vmatprep.mubr.bf16.mxu0 %v265
      %832 = vmatmul.mubr.bf16.gmra.mxu0 %v264
      %v833 = vpop.f32.mrf.mxu0
      %v834 = vadd.f32 %v357, %v833
      %v835 = vpop.f32.mrf.mxu0
      %v836 = vadd.f32 %v361, %v835
      %v837 = vpop.f32.mrf.mxu0
      %v838 = vadd.f32 %v357, %v837
      %v839 = vpop.f32.mrf.mxu0
      %v840 = vadd.f32 %v361, %v839
      %841 = vmatprep.mubr.bf16.mxu0 %v267
      %842 = vmatmul.mubr.bf16.gmra.mxu0 %v266
      %v843 = vpop.f32.mrf.mxu0
      %v844 = vadd.f32 %v357, %v843
      %v845 = vpop.f32.mrf.mxu0
      %v846 = vadd.f32 %v361, %v845
      %v847 = vpop.f32.mrf.mxu0
      %v848 = vadd.f32 %v357, %v847
      %v849 = vpop.f32.mrf.mxu0
      %v850 = vadd.f32 %v361, %v849
      %851 = vmatprep.mubr.bf16.mxu0 %v269
      %852 = vmatmul.mubr.bf16.gmra.mxu0 %v268
      %v853 = vpop.f32.mrf.mxu0
      %v854 = vadd.f32 %v357, %v853
      %v855 = vpop.f32.mrf.mxu0
      %v856 = vadd.f32 %v361, %v855
      %v857 = vpop.f32.mrf.mxu0
      %v858 = vadd.f32 %v357, %v857
      %v859 = vpop.f32.mrf.mxu0
      %v860 = vadd.f32 %v361, %v859
      %861 = vmatprep.mubr.bf16.mxu0 %v271
      %862 = vmatmul.mubr.bf16.gmra.mxu0 %v270
      %v863 = vpop.f32.mrf.mxu0
      %v864 = vadd.f32 %v357, %v863
      %v865 = vpop.f32.mrf.mxu0
      %v866 = vadd.f32 %v361, %v865
      %v867 = vpop.f32.mrf.mxu0
      %v868 = vadd.f32 %v357, %v867
      %v869 = vpop.f32.mrf.mxu0
      %v870 = vadd.f32 %v361, %v869
      %871 = vmatprep.mubr.bf16.mxu0 %v273
      %872 = vmatmul.mubr.bf16.gmra.mxu0 %v272
      %v873 = vpop.f32.mrf.mxu0
      %v874 = vadd.f32 %v357, %v873
      %v875 = vpop.f32.mrf.mxu0
      %v876 = vadd.f32 %v361, %v875
      %v877 = vpop.f32.mrf.mxu0
      %v878 = vadd.f32 %v357, %v877
      %v879 = vpop.f32.mrf.mxu0
      %v880 = vadd.f32 %v361, %v879
      %881 = vmatprep.mubr.bf16.mxu0 %v275
      %882 = vmatmul.mubr.bf16.gmra.mxu0 %v274
      %v883 = vpop.f32.mrf.mxu0
      %v884 = vadd.f32 %v357, %v883
      %v885 = vpop.f32.mrf.mxu0
      %v886 = vadd.f32 %v361, %v885
      %v887 = vpop.f32.mrf.mxu0
      %v888 = vadd.f32 %v357, %v887
      %v889 = vpop.f32.mrf.mxu0
      %v890 = vadd.f32 %v361, %v889
      %891 = vmatprep.mubr.bf16.mxu0 %v277
      %892 = vmatmul.mubr.bf16.gmra.mxu0 %v276
      %v893 = vpop.f32.mrf.mxu0
      %v894 = vadd.f32 %v357, %v893
      %v895 = vpop.f32.mrf.mxu0
      %v896 = vadd.f32 %v361, %v895
      %v897 = vpop.f32.mrf.mxu0
      %v898 = vadd.f32 %v357, %v897
      %v899 = vpop.f32.mrf.mxu0
      %v900 = vadd.f32 %v361, %v899
      %901 = vmatprep.mubr.bf16.mxu0 %v279
      %902 = vmatmul.mubr.bf16.gmra.mxu0 %v278
      %v903 = vpop.f32.mrf.mxu0
      %v904 = vadd.f32 %v357, %v903
      %v905 = vpop.f32.mrf.mxu0
      %v906 = vadd.f32 %v361, %v905
      %v907 = vpop.f32.mrf.mxu0
      %v908 = vadd.f32 %v357, %v907
      %v909 = vpop.f32.mrf.mxu0
      %v910 = vadd.f32 %v361, %v909
      %911 = vdwg.mxu0
      %v912 = vld [vmem:[%s3] sm:$0xf]
      %v914 = vlaneseq
      %v915 = vshrl.u32 %v914, 7
      %v916 = vsub.s32 0, %v915
      %v917 = vrot.slane %v912, %v916
      %v918 = vlaneseq
      %v919 = vshrl.u32 %v918, 7
      %v920 = vsub.s32 1, %v919
      %v921 = vrot.slane %v912, %v920
      %v922 = vlaneseq
      %v923 = vshrl.u32 %v922, 7
      %v924 = vsub.s32 2, %v923
      %v925 = vrot.slane %v912, %v924
      %v926 = vlaneseq
      %v927 = vshrl.u32 %v926, 7
      %v928 = vsub.s32 3, %v927
      %v929 = vrot.slane %v912, %v928
      %v934 = vmul.f32 %v721, %v917
      %v935 = vmul.f32 %v723, %v921
      %v936 = vmul.f32 %v834, %v925
      %v937 = vmul.f32 %v836, %v929
      %v938 = vmul.f32 %v725, %v917
      %v939 = vmul.f32 %v727, %v921
      %v940 = vmul.f32 %v838, %v925
      %v941 = vmul.f32 %v840, %v929
      %v942 = vmul.f32 %v731, %v917
      %v943 = vmul.f32 %v733, %v921
      %v944 = vmul.f32 %v844, %v925
      %v945 = vmul.f32 %v846, %v929
      %v946 = vmul.f32 %v735, %v917
      %v947 = vmul.f32 %v737, %v921
      %v948 = vmul.f32 %v848, %v925
      %v949 = vmul.f32 %v850, %v929
      %v950 = vmul.f32 %v741, %v917
      %v951 = vmul.f32 %v743, %v921
      %v952 = vmul.f32 %v854, %v925
      %v953 = vmul.f32 %v856, %v929
      %v954 = vmul.f32 %v745, %v917
      %v955 = vmul.f32 %v747, %v921
      %v956 = vmul.f32 %v858, %v925
      %v957 = vmul.f32 %v860, %v929
      %v958 = vmul.f32 %v751, %v917
      %v959 = vmul.f32 %v753, %v921
      %v960 = vmul.f32 %v864, %v925
      %v961 = vmul.f32 %v866, %v929
      %v962 = vmul.f32 %v755, %v917
      %v963 = vmul.f32 %v757, %v921
      %v964 = vmul.f32 %v868, %v925
      %v965 = vmul.f32 %v870, %v929
      %v966 = vmul.f32 %v761, %v917
      %v967 = vmul.f32 %v763, %v921
      %v968 = vmul.f32 %v874, %v925
      %v969 = vmul.f32 %v876, %v929
      %v970 = vmul.f32 %v765, %v917
      %v971 = vmul.f32 %v767, %v921
      %v972 = vmul.f32 %v878, %v925
      %v973 = vmul.f32 %v880, %v929
      %v974 = vmul.f32 %v771, %v917
      %v975 = vmul.f32 %v773, %v921
      %v976 = vmul.f32 %v884, %v925
      %v977 = vmul.f32 %v886, %v929
      %v978 = vmul.f32 %v775, %v917
      %v979 = vmul.f32 %v777, %v921
      %v980 = vmul.f32 %v888, %v925
      %v981 = vmul.f32 %v890, %v929
      %v982 = vmul.f32 %v781, %v917
      %v983 = vmul.f32 %v783, %v921
      %v984 = vmul.f32 %v894, %v925
      %v985 = vmul.f32 %v896, %v929
      %v986 = vmul.f32 %v785, %v917
      %v987 = vmul.f32 %v787, %v921
      %v988 = vmul.f32 %v898, %v925
      %v989 = vmul.f32 %v900, %v929
      %v990 = vmul.f32 %v791, %v917
      %v991 = vmul.f32 %v793, %v921
      %v992 = vmul.f32 %v904, %v925
      %v993 = vmul.f32 %v906, %v929
      %v994 = vmul.f32 %v795, %v917
      %v995 = vmul.f32 %v797, %v921
      %v996 = vmul.f32 %v908, %v925
      %v997 = vmul.f32 %v910, %v929
      %v998 = vadd.f32 %v934, %v935
      %v999 = vadd.f32 %v998, %v936
      %v1000 = vadd.f32 %v999, %v937
      %1001 = vadd.xlane.f32.xlu0 %v1000
      %v1002 = vpop.xlane.xlu0 %1001
      %v1003 = vadd.f32 %v938, %v939
      %v1004 = vadd.f32 %v1003, %v940
      %v1005 = vadd.f32 %v1004, %v941
      %1006 = vadd.xlane.f32.xlu0 %v1005
      %v1007 = vpop.xlane.xlu0 %1006
      %v1008 = vadd.f32 %v942, %v943
      %v1009 = vadd.f32 %v1008, %v944
      %v1010 = vadd.f32 %v1009, %v945
      %1011 = vadd.xlane.f32.xlu0 %v1010
      %v1012 = vpop.xlane.xlu0 %1011
      %v1013 = vadd.f32 %v946, %v947
      %v1014 = vadd.f32 %v1013, %v948
      %v1015 = vadd.f32 %v1014, %v949
      %1016 = vadd.xlane.f32.xlu0 %v1015
      %v1017 = vpop.xlane.xlu0 %1016
      %v1018 = vadd.f32 %v950, %v951
      %v1019 = vadd.f32 %v1018, %v952
      %v1020 = vadd.f32 %v1019, %v953
      %1021 = vadd.xlane.f32.xlu0 %v1020
      %v1022 = vpop.xlane.xlu0 %1021
      %v1023 = vadd.f32 %v954, %v955
      %v1024 = vadd.f32 %v1023, %v956
      %v1025 = vadd.f32 %v1024, %v957
      %1026 = vadd.xlane.f32.xlu0 %v1025
      %v1027 = vpop.xlane.xlu0 %1026
      %v1028 = vadd.f32 %v958, %v959
      %v1029 = vadd.f32 %v1028, %v960
      %v1030 = vadd.f32 %v1029, %v961
      %1031 = vadd.xlane.f32.xlu0 %v1030
      %v1032 = vpop.xlane.xlu0 %1031
      %v1033 = vadd.f32 %v962, %v963
      %v1034 = vadd.f32 %v1033, %v964
      %v1035 = vadd.f32 %v1034, %v965
      %1036 = vadd.xlane.f32.xlu0 %v1035
      %v1037 = vpop.xlane.xlu0 %1036
      %v1038 = vadd.f32 %v966, %v967
      %v1039 = vadd.f32 %v1038, %v968
      %v1040 = vadd.f32 %v1039, %v969
      %1041 = vadd.xlane.f32.xlu0 %v1040
      %v1042 = vpop.xlane.xlu0 %1041
      %v1043 = vadd.f32 %v970, %v971
      %v1044 = vadd.f32 %v1043, %v972
      %v1045 = vadd.f32 %v1044, %v973
      %1046 = vadd.xlane.f32.xlu0 %v1045
      %v1047 = vpop.xlane.xlu0 %1046
      %v1048 = vadd.f32 %v974, %v975
      %v1049 = vadd.f32 %v1048, %v976
      %v1050 = vadd.f32 %v1049, %v977
      %1051 = vadd.xlane.f32.xlu0 %v1050
      %v1052 = vpop.xlane.xlu0 %1051
      %v1053 = vadd.f32 %v978, %v979
      %v1054 = vadd.f32 %v1053, %v980
      %v1055 = vadd.f32 %v1054, %v981
      %1056 = vadd.xlane.f32.xlu0 %v1055
      %v1057 = vpop.xlane.xlu0 %1056
      %v1058 = vadd.f32 %v982, %v983
      %v1059 = vadd.f32 %v1058, %v984
      %v1060 = vadd.f32 %v1059, %v985
      %1061 = vadd.xlane.f32.xlu0 %v1060
      %v1062 = vpop.xlane.xlu0 %1061
      %v1063 = vadd.f32 %v986, %v987
      %v1064 = vadd.f32 %v1063, %v988
      %v1065 = vadd.f32 %v1064, %v989
      %1066 = vadd.xlane.f32.xlu0 %v1065
      %v1067 = vpop.xlane.xlu0 %1066
      %v1068 = vadd.f32 %v990, %v991
      %v1069 = vadd.f32 %v1068, %v992
      %v1070 = vadd.f32 %v1069, %v993
      %1071 = vadd.xlane.f32.xlu0 %v1070
      %v1072 = vpop.xlane.xlu0 %1071
      %v1073 = vadd.f32 %v994, %v995
      %v1074 = vadd.f32 %v1073, %v996
      %v1075 = vadd.f32 %v1074, %v997
      %1076 = vadd.xlane.f32.xlu0 %v1075
      %v1077 = vpop.xlane.xlu0 %1076
      %s1078 = sld [smem:[#allocation2]]
      %v1079 = vstv %s1078
      %v1080 = vadd.f32 %v1002, %v1079
      %v1081 = vadd.f32 %v1007, %v1079
      %v1082 = vadd.f32 %v1012, %v1079
      %v1083 = vadd.f32 %v1017, %v1079
      %v1084 = vadd.f32 %v1022, %v1079
      %v1085 = vadd.f32 %v1027, %v1079
      %v1086 = vadd.f32 %v1032, %v1079
      %v1087 = vadd.f32 %v1037, %v1079
      %v1088 = vadd.f32 %v1042, %v1079
      %v1089 = vadd.f32 %v1047, %v1079
      %v1090 = vadd.f32 %v1052, %v1079
      %v1091 = vadd.f32 %v1057, %v1079
      %v1092 = vadd.f32 %v1062, %v1079
      %v1093 = vadd.f32 %v1067, %v1079
      %v1094 = vadd.f32 %v1072, %v1079
      %v1095 = vadd.f32 %v1077, %v1079
      %v1096 = vxor.u32 %v1080, 2147483648
      %v1097 = vxor.u32 %v1081, 2147483648
      %v1098 = vxor.u32 %v1082, 2147483648
      %v1099 = vxor.u32 %v1083, 2147483648
      %v1100 = vxor.u32 %v1084, 2147483648
      %v1101 = vxor.u32 %v1085, 2147483648
      %v1102 = vxor.u32 %v1086, 2147483648
      %v1103 = vxor.u32 %v1087, 2147483648
      %v1104 = vxor.u32 %v1088, 2147483648
      %v1105 = vxor.u32 %v1089, 2147483648
      %v1106 = vxor.u32 %v1090, 2147483648
      %v1107 = vxor.u32 %v1091, 2147483648
      %v1108 = vxor.u32 %v1092, 2147483648
      %v1109 = vxor.u32 %v1093, 2147483648
      %v1110 = vxor.u32 %v1094, 2147483648
      %v1111 = vxor.u32 %v1095, 2147483648
      %v1112 = vmul.f32 %v1096, 1.442695
      %v1113 = vpow.pop %v1112
      %v1114 = vmul.f32 %v1097, 1.442695
      %v1115 = vpow.pop %v1114
      %v1116 = vmul.f32 %v1098, 1.442695
      %v1117 = vpow.pop %v1116
      %v1118 = vmul.f32 %v1099, 1.442695
      %v1119 = vpow.pop %v1118
      %v1120 = vmul.f32 %v1100, 1.442695
      %v1121 = vpow.pop %v1120
      %v1122 = vmul.f32 %v1101, 1.442695
      %v1123 = vpow.pop %v1122
      %v1124 = vmul.f32 %v1102, 1.442695
      %v1125 = vpow.pop %v1124
      %v1126 = vmul.f32 %v1103, 1.442695
      %v1127 = vpow.pop %v1126
      %v1128 = vmul.f32 %v1104, 1.442695
      %v1129 = vpow.pop %v1128
      %v1130 = vmul.f32 %v1105, 1.442695
      %v1131 = vpow.pop %v1130
      %v1132 = vmul.f32 %v1106, 1.442695
      %v1133 = vpow.pop %v1132
      %v1134 = vmul.f32 %v1107, 1.442695
      %v1135 = vpow.pop %v1134
      %v1136 = vmul.f32 %v1108, 1.442695
      %v1137 = vpow.pop %v1136
      %v1138 = vmul.f32 %v1109, 1.442695
      %v1139 = vpow.pop %v1138
      %v1140 = vmul.f32 %v1110, 1.442695
      %v1141 = vpow.pop %v1140
      %v1142 = vmul.f32 %v1111, 1.442695
      %v1143 = vpow.pop %v1142
      %v1144 = vadd.f32 %v1113, 1.0
      %v1145 = vadd.f32 %v1115, 1.0
      %v1146 = vadd.f32 %v1117, 1.0
      %v1147 = vadd.f32 %v1119, 1.0
      %v1148 = vadd.f32 %v1121, 1.0
      %v1149 = vadd.f32 %v1123, 1.0
      %v1150 = vadd.f32 %v1125, 1.0
      %v1151 = vadd.f32 %v1127, 1.0
      %v1152 = vadd.f32 %v1129, 1.0
      %v1153 = vadd.f32 %v1131, 1.0
      %v1154 = vadd.f32 %v1133, 1.0
      %v1155 = vadd.f32 %v1135, 1.0
      %v1156 = vadd.f32 %v1137, 1.0
      %v1157 = vadd.f32 %v1139, 1.0
      %v1158 = vadd.f32 %v1141, 1.0
      %v1159 = vadd.f32 %v1143, 1.0
      %v1160 = vrcp.pop %v1144
      %v1161 = vmul.f32 1.0, %v1160
      %v1162 = vrcp.pop %v1145
      %v1163 = vmul.f32 1.0, %v1162
      %v1164 = vrcp.pop %v1146
      %v1165 = vmul.f32 1.0, %v1164
      %v1166 = vrcp.pop %v1147
      %v1167 = vmul.f32 1.0, %v1166
      %v1168 = vrcp.pop %v1148
      %v1169 = vmul.f32 1.0, %v1168
      %v1170 = vrcp.pop %v1149
      %v1171 = vmul.f32 1.0, %v1170
      %v1172 = vrcp.pop %v1150
      %v1173 = vmul.f32 1.0, %v1172
      %v1174 = vrcp.pop %v1151
      %v1175 = vmul.f32 1.0, %v1174
      %v1176 = vrcp.pop %v1152
      %v1177 = vmul.f32 1.0, %v1176
      %v1178 = vrcp.pop %v1153
      %v1179 = vmul.f32 1.0, %v1178
      %v1180 = vrcp.pop %v1154
      %v1181 = vmul.f32 1.0, %v1180
      %v1182 = vrcp.pop %v1155
      %v1183 = vmul.f32 1.0, %v1182
      %v1184 = vrcp.pop %v1156
      %v1185 = vmul.f32 1.0, %v1184
      %v1186 = vrcp.pop %v1157
      %v1187 = vmul.f32 1.0, %v1186
      %v1188 = vrcp.pop %v1158
      %v1189 = vmul.f32 1.0, %v1188
      %v1190 = vrcp.pop %v1159
      %v1191 = vmul.f32 1.0, %v1190
      %vm1192 = vcmask 7168
      %1193 = vst.msk [vmem:[%s230] sm:$0xff] %vm1192, %v1161
      %1194 = vst.msk [vmem:[%s230 + $0x8] sm:$0xff] %vm1192, %v1163
      %1195 = vst.msk [vmem:[%s230 + $0x10] sm:$0xff] %vm1192, %v1165
      %1196 = vst.msk [vmem:[%s230 + $0x18] sm:$0xff] %vm1192, %v1167
      %1197 = vst.msk [vmem:[%s230 + $0x20] sm:$0xff] %vm1192, %v1169
      %1198 = vst.msk [vmem:[%s230 + $0x28] sm:$0xff] %vm1192, %v1171
      %1199 = vst.msk [vmem:[%s230 + $0x30] sm:$0xff] %vm1192, %v1173
      %1200 = vst.msk [vmem:[%s230 + $0x38] sm:$0xff] %vm1192, %v1175
      %1201 = vst.msk [vmem:[%s230 + $0x40] sm:$0xff] %vm1192, %v1177
      %1202 = vst.msk [vmem:[%s230 + $0x48] sm:$0xff] %vm1192, %v1179
      %1203 = vst.msk [vmem:[%s230 + $0x50] sm:$0xff] %vm1192, %v1181
      %1204 = vst.msk [vmem:[%s230 + $0x58] sm:$0xff] %vm1192, %v1183
      %1205 = vst.msk [vmem:[%s230 + $0x60] sm:$0xff] %vm1192, %v1185
      %1206 = vst.msk [vmem:[%s230 + $0x68] sm:$0xff] %vm1192, %v1187
      %1207 = vst.msk [vmem:[%s230 + $0x70] sm:$0xff] %vm1192, %v1189
      %1208 = vst.msk [vmem:[%s230 + $0x78] sm:$0xff] %vm1192, %v1191
      %s1209 = smul.u32 16, %s17
      %p1210 = scmp.lt.s32.totalorder %s1209, 31
      %s1211 = scalar_select %p1210, %s1209, 31
      %s1212 = smul.addr %s1211, 8
      %s1213 = scalar_lea.vmem %s5, %s1212
      // Predicated region
      $region41: #{lstm_net_forward.1} parent=39 // pred_check
        %p1214 = pneg %p145
      $region42: #{lstm_net_forward.1} parent=39 // pred_check_branch
        %1216 = sbr.rel (%p1214) target = $region44
      $region43: #{lstm_net_forward.1} parent=39 // pred_region
        %s1217 = smul.u32 16, %s17
      $region44: #{lstm_net_forward.1} parent=39 // pred_fallthru
        _
    $region40: #{lstm_net_forward.1} parent=5 // pred_fallthru
      _
    %p1218 = scmp.le.s32.totalorder 2, %s12
    // Predicated region
    $region45: #{lstm_net_forward.1} parent=5 // pred_check
      %p1219 = pneg %p1218
    $region46: #{lstm_net_forward.1} parent=5 // pred_check_branch
      %1221 = sbr.rel (%p1219) target = $region48
    $region47: #{lstm_net_forward.1} parent=5 // pred_region
      %s1222 = ssub.s32 %s12, 2
      // Predicated region
      $region49: #{lstm_net_forward.1} parent=47 // pred_check
        %p1223 = pneg %p151
      $region50: #{lstm_net_forward.1} parent=47 // pred_check_branch
        %1225 = sbr.rel (%p1223) target = $region52
      $region51: #{lstm_net_forward.1} parent=47 // pred_region
        %s1226 = smul.u32 16, %s18
        %p1227 = scmp.lt.s32.totalorder %s1226, 31
        %s1228 = scalar_select %p1227, %s1226, 31
        %s1229 = smul.addr %s1228, 8
        %s1230 = scalar_lea.vmem %s5, %s1229
      $region52: #{lstm_net_forward.1} parent=47 // pred_fallthru
        _
    $region48: #{lstm_net_forward.1} parent=5 // pred_fallthru
      _
  $region6: #{lstm_net_forward.1} parent=0 // loop_footer
    %s16 = sadd.s32 1, %s12
  $region7: #{lstm_net_forward.1} parent=0 // loop_footer_branch
    %11 = sbr.rel target = $region3
  $region8: #{lstm_net_forward.1} parent=0 // loop_exit
    _

</llo_original>
